<compile_context>
chip_gen: v5e
topology: v5e:2x2
jax: 0.10.0
libtpu: 0.0.40
codegen_flags: <defaults>
</compile_context>

<pallas_src>
import functools
import math

import jax
import jax.numpy as jnp
from jax import lax
from jax.experimental import pallas as pl
from jax.experimental.pallas import tpu as pltpu


def _cross_attn_kernel(tgt_ref, mem_ref, qpos_ref, kpos_ref, bias_ref,
                       wq_ref, wk_ref, wv_ref, bq_ref, wo_ref, bo_ref,
                       gamma_ref, beta_ref, out_ref, *, nhead, eps):
    """Whole layer (all batch elements) in a single invocation.

    tgt/qpos: (L*N, E)   mem/kpos: (S*N, E)   bias: (L*N, S*N) additive (0 / -1e30)
    weights are pre-transposed (x @ W^T form); 1/sqrt(dh) is folded into Wq/bq.
    """
    tgt = tgt_ref[...].astype(jnp.float32)            # (LN, E)
    mem = mem_ref[...].astype(jnp.float32)            # (SN, E)
    q_in = tgt + qpos_ref[...].astype(jnp.float32)
    k_in = mem + kpos_ref[...].astype(jnp.float32)

    E = tgt.shape[-1]
    dh = E // nhead

    # Full-width projections for the whole (flattened) batch: 3 MXU pushes total.
    q = jnp.dot(q_in, wq_ref[...], preferred_element_type=jnp.float32) + bq_ref[...]   # (LN, E)
    k = jnp.dot(k_in, wk_ref[...], preferred_element_type=jnp.float32)                 # (SN, E)
    v = jnp.dot(mem,  wv_ref[...], preferred_element_type=jnp.float32)                 # (SN, E)

    bias = bias_ref[...]                               # (LN, SN), 0 on same-batch pairs else -1e30

    heads = []
    for h in range(nhead):                             # static unroll; only score & P@V per head
        sl = slice(h * dh, (h + 1) * dh)               # static lane slice
        qh, kh, vh = q[:, sl], k[:, sl], v[:, sl]      # (LN, dh), (SN, dh), (SN, dh)

        # scores: contract head dims directly ("nt" matmul, no materialized transpose)
        s = lax.dot_general(qh, kh, (((1,), (1,)), ((), ())),
                            preferred_element_type=jnp.float32)                        # (LN, SN)
        s = s + bias
        s = s - jnp.max(s, axis=-1, keepdims=True)
        p = jnp.exp(s)
        p = p / jnp.sum(p, axis=-1, keepdims=True)     # exact normalization
        heads.append(jnp.dot(p, vh, preferred_element_type=jnp.float32))               # (LN, dh)

    attn = jnp.concatenate(heads, axis=-1)             # (LN, E), one lane concat
    attn_out = jnp.dot(attn, wo_ref[...], preferred_element_type=jnp.float32)          # 1 MXU push

    # Residual (dropout p=0) + effective out-proj bias + LayerNorm (post-norm).
    x = tgt + attn_out + bo_ref[...]
    mu = jnp.mean(x, axis=-1, keepdims=True)
    var = jnp.mean((x - mu) ** 2, axis=-1, keepdims=True)
    y = (x - mu) * lax.rsqrt(var + eps)
    y = y * gamma_ref[...] + beta_ref[...]

    out_ref[...] = y.astype(out_ref.dtype)


@functools.partial(jax.jit, static_argnames=("nhead",))
def cross_attention_layer(tgt, memory, query_pos, pos, params, *, nhead):
    """tgt/query_pos: (L, N, E) seq-first, memory/pos: (S, N, E) seq-first (PyTorch layout)."""
    L, N, E = tgt.shape
    S = memory.shape[0]
    dh = E // nhead
    scale = 1.0 / math.sqrt(dh)

    # FREE contiguous reshapes (no transpose, no copy): rows are interleaved (l0 b0, l0 b1, ...).
    tgt_f = tgt.reshape(L * N, E)
    mem_f = memory.reshape(S * N, E)
    qpos_f = query_pos.reshape(L * N, E)
    kpos_f = pos.reshape(S * N, E)

    # Block-diagonal additive bias keeping attention within each batch element.
    qb = jnp.arange(L * N, dtype=jnp.int32) % N
    kb = jnp.arange(S * N, dtype=jnp.int32) % N
    bias = jnp.where(qb[:, None] == kb[None, :], 0.0, -1e30).astype(jnp.float32)
    # TODO(synk): fold memory_mask / memory_key_padding_mask into `bias` here when provided.

    # Host-side weight prep (fused by jit): torch Linear is x @ W^T, so pass W^T slabs.
    wq_t = params["wq"].T * scale                       # 1/sqrt(dh) folded into Q projection
    bq_s = params["bq"] * scale                         # (1, E)
    wk_t = params["wk"].T                               # bk dropped: constant along softmax axis
    wv_t = params["wv"].T
    wo_t = params["wo"].T
    # bv folded through the out-projection (softmax rows sum to 1): bo_eff = bo + bv @ Wo^T
    bo_eff = params["bo"] + jnp.dot(params["bv"], wo_t, precision=lax.Precision.HIGHEST)
    gamma, beta = params["gamma"], params["beta"]

    kernel = functools.partial(_cross_attn_kernel, nhead=nhead, eps=1e-5)
    vmem = pl.BlockSpec(memory_space=pltpu.MemorySpace.VMEM)   # whole array resident in VMEM

    out_f = pl.pallas_call(
        kernel,
        out_shape=jax.ShapeDtypeStruct((L * N, E), tgt.dtype),
        in_specs=[vmem] * 13,
        out_specs=vmem,
    )(tgt_f, mem_f, qpos_f, kpos_f, bias,
      wq_t, wk_t, wv_t, bq_s, wo_t, bo_eff, gamma, beta)

    return out_f.reshape(L, N, E)                      # free reshape back to seq-first


def _reference(tgt, memory, query_pos, pos, params, *, nhead):
    """Pure-JAX reference mirroring PyTorch nn.MultiheadAttention + residual + LayerNorm.

    All matmuls use HIGHEST precision so the reference is ~f32-exact on any backend.
    """
    L, N, E = tgt.shape
    S = memory.shape[0]
    dh = E // nhead
    scale = 1.0 / math.sqrt(dh)
    hp = lax.Precision.HIGHEST

    q_in = tgt + query_pos
    k_in = memory + pos
    v_in = memory

    def proj(x, w, b):
        return jnp.einsum("snc,dc->snd", x, w, precision=hp) + b[0]

    q = proj(q_in, params["wq"], params["bq"])
    k = proj(k_in, params["wk"], params["bk"])
    v = proj(v_in, params["wv"], params["bv"])

    def split(x, seq):                                  # (seq, N, E) -> (N, H, seq, dh)
        return jnp.transpose(x.reshape(seq, N, nhead, dh), (1, 2, 0, 3))

    qh, kh, vh = split(q, L), split(k, S), split(v, S)
    s = jnp.einsum("nhld,nhsd->nhls", qh, kh, precision=hp) * scale
    p = jax.nn.softmax(s, axis=-1)
    o = jnp.einsum("nhls,nhsd->nhld", p, vh, precision=hp)     # (N, H, L, dh)
    o = jnp.transpose(o, (2, 0, 1, 3)).reshape(L, N, E)
    o = jnp.einsum("lnc,dc->lnd", o, params["wo"], precision=hp) + params["bo"][0]

    x = tgt + o
    mu = jnp.mean(x, axis=-1, keepdims=True)
    var = jnp.mean((x - mu) ** 2, axis=-1, keepdims=True)
    y = (x - mu) / jnp.sqrt(var + 1e-5)
    return y * params["gamma"][0] + params["beta"][0]


def _xavier_uniform(key, shape):
    fan_out, fan_in = shape
    bound = math.sqrt(6.0 / (fan_in + fan_out))
    return jax.random.uniform(key, shape, jnp.float32, -bound, bound)


if __name__ == "__main__":
    d_model, nhead = 32, 4
    L, S, N = 8, 16, 2    # queries, memory length, batch

    key = jax.random.PRNGKey(0)
    keys = jax.random.split(key, 10)

    params = {
        "wq": _xavier_uniform(keys[0], (d_model, d_model)),
        "wk": _xavier_uniform(keys[1], (d_model, d_model)),
        "wv": _xavier_uniform(keys[2], (d_model, d_model)),
        "bq": jnp.zeros((1, d_model), jnp.float32),
        "bk": jnp.zeros((1, d_model), jnp.float32),
        "bv": jnp.zeros((1, d_model), jnp.float32),
        "wo": _xavier_uniform(keys[3], (d_model, d_model)),
        "bo": jnp.zeros((1, d_model), jnp.float32),
        "gamma": jnp.ones((1, d_model), jnp.float32),
        "beta": jnp.zeros((1, d_model), jnp.float32),
    }

    tgt = jax.random.normal(keys[4], (L, N, d_model), jnp.float32)
    memory = jax.random.normal(keys[5], (S, N, d_model), jnp.float32)
    query_pos = jax.random.normal(keys[6], (L, N, d_model), jnp.float32)
    pos = jax.random.normal(keys[7], (S, N, d_model), jnp.float32)

    out = cross_attention_layer(tgt, memory, query_pos, pos, params, nhead=nhead)
    out = jax.block_until_ready(out)

    ref = _reference(tgt, memory, query_pos, pos, params, nhead=nhead)
    assert out.shape == (L, N, d_model)
    # Expected agreement ~1e-5; 1e-2 tolerance only absorbs backend matmul-precision differences
    # while still catching any real layout / head-split / normalization bug (those are O(1)).
    max_err = float(jnp.max(jnp.abs(out - ref)))
    assert jnp.allclose(out, ref, atol=1e-2, rtol=1e-2), f"mismatch vs reference (max abs err {max_err})"

    print("KERNEL_OK")
</pallas_src>

<mosaic_0001>
module attributes {stable_mosaic.version = 11 : i64} {
  func.func @_cross_attn_kernel(%arg0: memref<16x32xf32, #tpu.memory_space<vmem>>, %arg1: memref<32x32xf32, #tpu.memory_space<vmem>>, %arg2: memref<16x32xf32, #tpu.memory_space<vmem>>, %arg3: memref<32x32xf32, #tpu.memory_space<vmem>>, %arg4: memref<16x32xf32, #tpu.memory_space<vmem>>, %arg5: memref<32x32xf32, #tpu.memory_space<vmem>>, %arg6: memref<32x32xf32, #tpu.memory_space<vmem>>, %arg7: memref<32x32xf32, #tpu.memory_space<vmem>>, %arg8: memref<1x32xf32, #tpu.memory_space<vmem>>, %arg9: memref<32x32xf32, #tpu.memory_space<vmem>>, %arg10: memref<1x32xf32, #tpu.memory_space<vmem>>, %arg11: memref<1x32xf32, #tpu.memory_space<vmem>>, %arg12: memref<1x32xf32, #tpu.memory_space<vmem>>, %arg13: memref<16x32xf32, #tpu.memory_space<vmem>>) attributes {dimension_semantics = [], scalar_prefetch = 0 : i64, scratch_operands = 0 : i64, tpu.core_type = #tpu.core_type<tc>} {
    %c0 = arith.constant 0 : index
    %c0_0 = arith.constant 0 : index
    %0 = vector.load %arg0[%c0, %c0_0] : memref<16x32xf32, #tpu.memory_space<vmem>>, vector<16x32xf32>
    %c0_1 = arith.constant 0 : index
    %c0_2 = arith.constant 0 : index
    %1 = vector.load %arg1[%c0_1, %c0_2] : memref<32x32xf32, #tpu.memory_space<vmem>>, vector<32x32xf32>
    %c0_3 = arith.constant 0 : index
    %c0_4 = arith.constant 0 : index
    %2 = vector.load %arg2[%c0_3, %c0_4] : memref<16x32xf32, #tpu.memory_space<vmem>>, vector<16x32xf32>
    %3 = arith.addf %0, %2 : vector<16x32xf32>
    %c0_5 = arith.constant 0 : index
    %c0_6 = arith.constant 0 : index
    %4 = vector.load %arg3[%c0_5, %c0_6] : memref<32x32xf32, #tpu.memory_space<vmem>>, vector<32x32xf32>
    %5 = arith.addf %1, %4 : vector<32x32xf32>
    %c0_7 = arith.constant 0 : index
    %c0_8 = arith.constant 0 : index
    %6 = vector.load %arg5[%c0_7, %c0_8] : memref<32x32xf32, #tpu.memory_space<vmem>>, vector<32x32xf32>
    %cst = arith.constant dense<0.000000e+00> : vector<16x32xf32>
    %7 = tpu.matmul %3, %6, %cst {dimension_numbers = #tpu.dot_dimension_numbers<[1], [0], [0], [1], [0, 0, 1, 1], [], []>} : vector<16x32xf32>, vector<32x32xf32>, vector<16x32xf32> -> vector<16x32xf32>
    %c0_9 = arith.constant 0 : index
    %c0_10 = arith.constant 0 : index
    %8 = vector.load %arg8[%c0_9, %c0_10] : memref<1x32xf32, #tpu.memory_space<vmem>>, vector<1x32xf32>
    %9 = vector.broadcast %8 : vector<1x32xf32> to vector<16x32xf32>
    %10 = arith.addf %7, %9 : vector<16x32xf32>
    %c0_11 = arith.constant 0 : index
    %c0_12 = arith.constant 0 : index
    %11 = vector.load %arg6[%c0_11, %c0_12] : memref<32x32xf32, #tpu.memory_space<vmem>>, vector<32x32xf32>
    %cst_13 = arith.constant dense<0.000000e+00> : vector<32x32xf32>
    %12 = tpu.matmul %5, %11, %cst_13 {dimension_numbers = #tpu.dot_dimension_numbers<[1], [0], [0], [1], [0, 0, 1, 1], [], []>} : vector<32x32xf32>, vector<32x32xf32>, vector<32x32xf32> -> vector<32x32xf32>
    %c0_14 = arith.constant 0 : index
    %c0_15 = arith.constant 0 : index
    %13 = vector.load %arg7[%c0_14, %c0_15] : memref<32x32xf32, #tpu.memory_space<vmem>>, vector<32x32xf32>
    %cst_16 = arith.constant dense<0.000000e+00> : vector<32x32xf32>
    %14 = tpu.matmul %1, %13, %cst_16 {dimension_numbers = #tpu.dot_dimension_numbers<[1], [0], [0], [1], [0, 0, 1, 1], [], []>} : vector<32x32xf32>, vector<32x32xf32>, vector<32x32xf32> -> vector<32x32xf32>
    %c0_17 = arith.constant 0 : index
    %c0_18 = arith.constant 0 : index
    %15 = vector.load %arg4[%c0_17, %c0_18] : memref<16x32xf32, #tpu.memory_space<vmem>>, vector<16x32xf32>
    %16 = vector.extract_strided_slice %10 {offsets = [0, 0], sizes = [16, 8], strides = [1, 1]} : vector<16x32xf32> to vector<16x8xf32>
    %17 = vector.extract_strided_slice %12 {offsets = [0, 0], sizes = [32, 8], strides = [1, 1]} : vector<32x32xf32> to vector<32x8xf32>
    %18 = vector.extract_strided_slice %14 {offsets = [0, 0], sizes = [32, 8], strides = [1, 1]} : vector<32x32xf32> to vector<32x8xf32>
    %cst_19 = arith.constant dense<0.000000e+00> : vector<16x32xf32>
    %19 = tpu.matmul %16, %17, %cst_19 {dimension_numbers = #tpu.dot_dimension_numbers<[1], [1], [0], [0], [0, 0, 1, 0], [], []>} : vector<16x8xf32>, vector<32x8xf32>, vector<16x32xf32> -> vector<16x32xf32>
    %20 = arith.addf %19, %15 : vector<16x32xf32>
    %cst_20 = arith.constant dense<0xFF800000> : vector<16xf32>
    %21 = vector.multi_reduction <maximumf>, %20, %cst_20 [1] : vector<16x32xf32> to vector<16xf32>
    %22 = vector.shape_cast %21 : vector<16xf32> to vector<16x1xf32>
    %23 = vector.broadcast %22 : vector<16x1xf32> to vector<16x32xf32>
    %24 = arith.subf %20, %23 : vector<16x32xf32>
    %25 = math.exp %24 : vector<16x32xf32>
    %cst_21 = arith.constant dense<0.000000e+00> : vector<16xf32>
    %26 = vector.multi_reduction <add>, %25, %cst_21 [1] : vector<16x32xf32> to vector<16xf32>
    %27 = vector.shape_cast %26 : vector<16xf32> to vector<16x1xf32>
    %28 = vector.broadcast %27 : vector<16x1xf32> to vector<16x32xf32>
    %29 = arith.divf %25, %28 : vector<16x32xf32>
    %cst_22 = arith.constant dense<0.000000e+00> : vector<16x8xf32>
    %30 = tpu.matmul %29, %18, %cst_22 {dimension_numbers = #tpu.dot_dimension_numbers<[1], [0], [0], [1], [0, 0, 1, 1], [], []>} : vector<16x32xf32>, vector<32x8xf32>, vector<16x8xf32> -> vector<16x8xf32>
    %31 = vector.extract_strided_slice %10 {offsets = [0, 8], sizes = [16, 8], strides = [1, 1]} : vector<16x32xf32> to vector<16x8xf32>
    %32 = vector.extract_strided_slice %12 {offsets = [0, 8], sizes = [32, 8], strides = [1, 1]} : vector<32x32xf32> to vector<32x8xf32>
    %33 = vector.extract_strided_slice %14 {offsets = [0, 8], sizes = [32, 8], strides = [1, 1]} : vector<32x32xf32> to vector<32x8xf32>
    %cst_23 = arith.constant dense<0.000000e+00> : vector<16x32xf32>
    %34 = tpu.matmul %31, %32, %cst_23 {dimension_numbers = #tpu.dot_dimension_numbers<[1], [1], [0], [0], [0, 0, 1, 0], [], []>} : vector<16x8xf32>, vector<32x8xf32>, vector<16x32xf32> -> vector<16x32xf32>
    %35 = arith.addf %34, %15 : vector<16x32xf32>
    %cst_24 = arith.constant dense<0xFF800000> : vector<16xf32>
    %36 = vector.multi_reduction <maximumf>, %35, %cst_24 [1] : vector<16x32xf32> to vector<16xf32>
    %37 = vector.shape_cast %36 : vector<16xf32> to vector<16x1xf32>
    %38 = vector.broadcast %37 : vector<16x1xf32> to vector<16x32xf32>
    %39 = arith.subf %35, %38 : vector<16x32xf32>
    %40 = math.exp %39 : vector<16x32xf32>
    %cst_25 = arith.constant dense<0.000000e+00> : vector<16xf32>
    %41 = vector.multi_reduction <add>, %40, %cst_25 [1] : vector<16x32xf32> to vector<16xf32>
    %42 = vector.shape_cast %41 : vector<16xf32> to vector<16x1xf32>
    %43 = vector.broadcast %42 : vector<16x1xf32> to vector<16x32xf32>
    %44 = arith.divf %40, %43 : vector<16x32xf32>
    %cst_26 = arith.constant dense<0.000000e+00> : vector<16x8xf32>
    %45 = tpu.matmul %44, %33, %cst_26 {dimension_numbers = #tpu.dot_dimension_numbers<[1], [0], [0], [1], [0, 0, 1, 1], [], []>} : vector<16x32xf32>, vector<32x8xf32>, vector<16x8xf32> -> vector<16x8xf32>
    %46 = vector.extract_strided_slice %10 {offsets = [0, 16], sizes = [16, 8], strides = [1, 1]} : vector<16x32xf32> to vector<16x8xf32>
    %47 = vector.extract_strided_slice %12 {offsets = [0, 16], sizes = [32, 8], strides = [1, 1]} : vector<32x32xf32> to vector<32x8xf32>
    %48 = vector.extract_strided_slice %14 {offsets = [0, 16], sizes = [32, 8], strides = [1, 1]} : vector<32x32xf32> to vector<32x8xf32>
    %cst_27 = arith.constant dense<0.000000e+00> : vector<16x32xf32>
    %49 = tpu.matmul %46, %47, %cst_27 {dimension_numbers = #tpu.dot_dimension_numbers<[1], [1], [0], [0], [0, 0, 1, 0], [], []>} : vector<16x8xf32>, vector<32x8xf32>, vector<16x32xf32> -> vector<16x32xf32>
    %50 = arith.addf %49, %15 : vector<16x32xf32>
    %cst_28 = arith.constant dense<0xFF800000> : vector<16xf32>
    %51 = vector.multi_reduction <maximumf>, %50, %cst_28 [1] : vector<16x32xf32> to vector<16xf32>
    %52 = vector.shape_cast %51 : vector<16xf32> to vector<16x1xf32>
    %53 = vector.broadcast %52 : vector<16x1xf32> to vector<16x32xf32>
    %54 = arith.subf %50, %53 : vector<16x32xf32>
    %55 = math.exp %54 : vector<16x32xf32>
    %cst_29 = arith.constant dense<0.000000e+00> : vector<16xf32>
    %56 = vector.multi_reduction <add>, %55, %cst_29 [1] : vector<16x32xf32> to vector<16xf32>
    %57 = vector.shape_cast %56 : vector<16xf32> to vector<16x1xf32>
    %58 = vector.broadcast %57 : vector<16x1xf32> to vector<16x32xf32>
    %59 = arith.divf %55, %58 : vector<16x32xf32>
    %cst_30 = arith.constant dense<0.000000e+00> : vector<16x8xf32>
    %60 = tpu.matmul %59, %48, %cst_30 {dimension_numbers = #tpu.dot_dimension_numbers<[1], [0], [0], [1], [0, 0, 1, 1], [], []>} : vector<16x32xf32>, vector<32x8xf32>, vector<16x8xf32> -> vector<16x8xf32>
    %61 = vector.extract_strided_slice %10 {offsets = [0, 24], sizes = [16, 8], strides = [1, 1]} : vector<16x32xf32> to vector<16x8xf32>
    %62 = vector.extract_strided_slice %12 {offsets = [0, 24], sizes = [32, 8], strides = [1, 1]} : vector<32x32xf32> to vector<32x8xf32>
    %63 = vector.extract_strided_slice %14 {offsets = [0, 24], sizes = [32, 8], strides = [1, 1]} : vector<32x32xf32> to vector<32x8xf32>
    %cst_31 = arith.constant dense<0.000000e+00> : vector<16x32xf32>
    %64 = tpu.matmul %61, %62, %cst_31 {dimension_numbers = #tpu.dot_dimension_numbers<[1], [1], [0], [0], [0, 0, 1, 0], [], []>} : vector<16x8xf32>, vector<32x8xf32>, vector<16x32xf32> -> vector<16x32xf32>
    %65 = arith.addf %64, %15 : vector<16x32xf32>
    %cst_32 = arith.constant dense<0xFF800000> : vector<16xf32>
    %66 = vector.multi_reduction <maximumf>, %65, %cst_32 [1] : vector<16x32xf32> to vector<16xf32>
    %67 = vector.shape_cast %66 : vector<16xf32> to vector<16x1xf32>
    %68 = vector.broadcast %67 : vector<16x1xf32> to vector<16x32xf32>
    %69 = arith.subf %65, %68 : vector<16x32xf32>
    %70 = math.exp %69 : vector<16x32xf32>
    %cst_33 = arith.constant dense<0.000000e+00> : vector<16xf32>
    %71 = vector.multi_reduction <add>, %70, %cst_33 [1] : vector<16x32xf32> to vector<16xf32>
    %72 = vector.shape_cast %71 : vector<16xf32> to vector<16x1xf32>
    %73 = vector.broadcast %72 : vector<16x1xf32> to vector<16x32xf32>
    %74 = arith.divf %70, %73 : vector<16x32xf32>
    %cst_34 = arith.constant dense<0.000000e+00> : vector<16x8xf32>
    %75 = tpu.matmul %74, %63, %cst_34 {dimension_numbers = #tpu.dot_dimension_numbers<[1], [0], [0], [1], [0, 0, 1, 1], [], []>} : vector<16x32xf32>, vector<32x8xf32>, vector<16x8xf32> -> vector<16x8xf32>
    %76 = tpu.concatenate %30, %45, %60, %75 in 1 : vector<16x8xf32>, vector<16x8xf32>, vector<16x8xf32>, vector<16x8xf32> -> vector<16x32xf32>
    %c0_35 = arith.constant 0 : index
    %c0_36 = arith.constant 0 : index
    %77 = vector.load %arg9[%c0_35, %c0_36] : memref<32x32xf32, #tpu.memory_space<vmem>>, vector<32x32xf32>
    %cst_37 = arith.constant dense<0.000000e+00> : vector<16x32xf32>
    %78 = tpu.matmul %76, %77, %cst_37 {dimension_numbers = #tpu.dot_dimension_numbers<[1], [0], [0], [1], [0, 0, 1, 1], [], []>} : vector<16x32xf32>, vector<32x32xf32>, vector<16x32xf32> -> vector<16x32xf32>
    %79 = arith.addf %0, %78 : vector<16x32xf32>
    %c0_38 = arith.constant 0 : index
    %c0_39 = arith.constant 0 : index
    %80 = vector.load %arg10[%c0_38, %c0_39] : memref<1x32xf32, #tpu.memory_space<vmem>>, vector<1x32xf32>
    %81 = vector.broadcast %80 : vector<1x32xf32> to vector<16x32xf32>
    %82 = arith.addf %79, %81 : vector<16x32xf32>
    %cst_40 = arith.constant dense<0.000000e+00> : vector<16xf32>
    %83 = vector.multi_reduction <add>, %82, %cst_40 [1] : vector<16x32xf32> to vector<16xf32>
    %84 = vector.shape_cast %83 : vector<16xf32> to vector<16x1xf32>
    %cst_41 = arith.constant 3.200000e+01 : f32
    %85 = vector.broadcast %cst_41 : f32 to vector<16x1xf32>
    %86 = arith.divf %84, %85 : vector<16x1xf32>
    %87 = vector.broadcast %86 : vector<16x1xf32> to vector<16x32xf32>
    %88 = arith.subf %82, %87 : vector<16x32xf32>
    %89 = arith.mulf %88, %88 : vector<16x32xf32>
    %cst_42 = arith.constant dense<0.000000e+00> : vector<16xf32>
    %90 = vector.multi_reduction <add>, %89, %cst_42 [1] : vector<16x32xf32> to vector<16xf32>
    %91 = vector.shape_cast %90 : vector<16xf32> to vector<16x1xf32>
    %cst_43 = arith.constant 3.200000e+01 : f32
    %92 = vector.broadcast %cst_43 : f32 to vector<16x1xf32>
    %93 = arith.divf %91, %92 : vector<16x1xf32>
    %94 = vector.broadcast %86 : vector<16x1xf32> to vector<16x32xf32>
    %95 = arith.subf %82, %94 : vector<16x32xf32>
    %cst_44 = arith.constant 9.99999974E-6 : f32
    %96 = vector.broadcast %cst_44 : f32 to vector<16x1xf32>
    %97 = arith.addf %93, %96 : vector<16x1xf32>
    %98 = math.rsqrt %97 : vector<16x1xf32>
    %99 = vector.broadcast %98 : vector<16x1xf32> to vector<16x32xf32>
    %100 = arith.mulf %95, %99 : vector<16x32xf32>
    %c0_45 = arith.constant 0 : index
    %c0_46 = arith.constant 0 : index
    %101 = vector.load %arg11[%c0_45, %c0_46] : memref<1x32xf32, #tpu.memory_space<vmem>>, vector<1x32xf32>
    %102 = vector.broadcast %101 : vector<1x32xf32> to vector<16x32xf32>
    %103 = arith.mulf %100, %102 : vector<16x32xf32>
    %c0_47 = arith.constant 0 : index
    %c0_48 = arith.constant 0 : index
    %104 = vector.load %arg12[%c0_47, %c0_48] : memref<1x32xf32, #tpu.memory_space<vmem>>, vector<1x32xf32>
    %105 = vector.broadcast %104 : vector<1x32xf32> to vector<16x32xf32>
    %106 = arith.addf %103, %105 : vector<16x32xf32>
    %c0_49 = arith.constant 0 : index
    %c0_50 = arith.constant 0 : index
    %107 = vector.load %arg13[%c0_49, %c0_50] : memref<16x32xf32, #tpu.memory_space<vmem>>, vector<16x32xf32>
    tpu.vector_store %arg13[%c0_49, %c0_50], %106 {strides = array<i32>} : memref<16x32xf32, #tpu.memory_space<vmem>>, vector<16x32xf32>,
    return
  }
}

</mosaic_0001>

<llo_original>
// kernel: cross_attention_layer.1
$region0: #{cross_attention_layer.1}
  #allocation0 [shape = 'u32[]', space=smem, size = 0x4, offset = 0x4, fixed_abs, tag = 'smem constant byte address 0x4 - core index']
  #allocation1 [shape = 'u32[72,128]{1,0:T(1,128)}', space=vmem, size = 0x9000, scoped, tag = 'internal scratch']
  %s0 = inlined_call_operand.vmem [shape: f32[16,32], index: 0, kind: input, shape index: {}]
  %s1 = inlined_call_operand.vmem [shape: f32[32,32], index: 1, kind: input, shape index: {}]
  %s2 = inlined_call_operand.vmem [shape: f32[16,32], index: 2, kind: input, shape index: {}]
  %s3 = inlined_call_operand.vmem [shape: f32[32,32], index: 3, kind: input, shape index: {}]
  %s4 = inlined_call_operand.vmem [shape: f32[16,32], index: 4, kind: input, shape index: {}]
  %s5 = inlined_call_operand.vmem [shape: f32[32,32], index: 5, kind: input, shape index: {}]
  %s6 = inlined_call_operand.vmem [shape: f32[32,32], index: 6, kind: input, shape index: {}]
  %s7 = inlined_call_operand.vmem [shape: f32[32,32], index: 7, kind: input, shape index: {}]
  %s8 = inlined_call_operand.vmem [shape: f32[1,32], index: 8, kind: input, shape index: {}]
  %s9 = inlined_call_operand.vmem [shape: f32[32,32], index: 9, kind: input, shape index: {}]
  %s10 = inlined_call_operand.vmem [shape: f32[1,32], index: 10, kind: input, shape index: {}]
  %s11 = inlined_call_operand.vmem [shape: f32[1,32], index: 11, kind: input, shape index: {}]
  %s12 = inlined_call_operand.vmem [shape: f32[1,32], index: 12, kind: input, shape index: {}]
  %s13 = inlined_call_operand.hbm [shape: f32[16,32], index: 13, kind: output, shape index: {}]
  %s14 = sld [smem:[#allocation0]]
  $region62: #{cross_attention_layer.1} parent=0
    _
  %s16 = ssub.s32 1, %s14
  %s17 = scalar_select 0, %s16, %s14
  $region1: #{cross_attention_layer.1} parent=0
    #allocation2 [shape = 'u8[8192]{0}', space=vmem, size = 0x2000, scoped, tag = 'output window, operand 0, single buffered']
    #allocation3 [shape = 's32[1]{0}', space=sflag, size = 0x4, scoped, tag = 'scoped memory for cross_attention_layer.1']
    %18 = vsyncpa [#allocation3], 0
    // Predicated region
    $region2: #{cross_attention_layer.1} parent=1 // pred_check
      _
    $region3: #{cross_attention_layer.1} parent=1 // pred_check_branch
      %20 = sbr.rel (0) target = $region5
    $region4: #{cross_attention_layer.1} parent=1 // pred_region
      _
    $region5: #{cross_attention_layer.1} parent=1 // pred_fallthru
      _
    // Predicated region
    $region6: #{cross_attention_layer.1} parent=1 // pred_check
      _
    $region7: #{cross_attention_layer.1} parent=1 // pred_check_branch
      %22 = sbr.rel (0) target = $region9
    $region8: #{cross_attention_layer.1} parent=1 // pred_region
      _
    $region9: #{cross_attention_layer.1} parent=1 // pred_fallthru
      _
    // Predicated region
    $region10: #{cross_attention_layer.1} parent=1 // pred_check
      _
    $region11: #{cross_attention_layer.1} parent=1 // pred_check_branch
      %24 = sbr.rel (0) target = $region13
    $region12: #{cross_attention_layer.1} parent=1 // pred_region
      _
    $region13: #{cross_attention_layer.1} parent=1 // pred_fallthru
      _
    // Predicated region
    $region14: #{cross_attention_layer.1} parent=1 // pred_check
      _
    $region15: #{cross_attention_layer.1} parent=1 // pred_check_branch
      %26 = sbr.rel (0) target = $region17
    $region16: #{cross_attention_layer.1} parent=1 // pred_region
      _
    $region17: #{cross_attention_layer.1} parent=1 // pred_fallthru
      _
    // Predicated region
    $region18: #{cross_attention_layer.1} parent=1 // pred_check
      _
    $region19: #{cross_attention_layer.1} parent=1 // pred_check_branch
      %28 = sbr.rel (0) target = $region21
    $region20: #{cross_attention_layer.1} parent=1 // pred_region
      _
    $region21: #{cross_attention_layer.1} parent=1 // pred_fallthru
      _
    // Predicated region
    $region22: #{cross_attention_layer.1} parent=1 // pred_check
      _
    $region23: #{cross_attention_layer.1} parent=1 // pred_check_branch
      %30 = sbr.rel (0) target = $region25
    $region24: #{cross_attention_layer.1} parent=1 // pred_region
      _
    $region25: #{cross_attention_layer.1} parent=1 // pred_fallthru
      _
    // Predicated region
    $region26: #{cross_attention_layer.1} parent=1 // pred_check
      _
    $region27: #{cross_attention_layer.1} parent=1 // pred_check_branch
      %32 = sbr.rel (0) target = $region29
    $region28: #{cross_attention_layer.1} parent=1 // pred_region
      _
    $region29: #{cross_attention_layer.1} parent=1 // pred_fallthru
      _
    // Predicated region
    $region30: #{cross_attention_layer.1} parent=1 // pred_check
      _
    $region31: #{cross_attention_layer.1} parent=1 // pred_check_branch
      %34 = sbr.rel (0) target = $region33
    $region32: #{cross_attention_layer.1} parent=1 // pred_region
      _
    $region33: #{cross_attention_layer.1} parent=1 // pred_fallthru
      _
    // Predicated region
    $region34: #{cross_attention_layer.1} parent=1 // pred_check
      _
    $region35: #{cross_attention_layer.1} parent=1 // pred_check_branch
      %36 = sbr.rel (0) target = $region37
    $region36: #{cross_attention_layer.1} parent=1 // pred_region
      _
    $region37: #{cross_attention_layer.1} parent=1 // pred_fallthru
      _
    // Predicated region
    $region38: #{cross_attention_layer.1} parent=1 // pred_check
      _
    $region39: #{cross_attention_layer.1} parent=1 // pred_check_branch
      %38 = sbr.rel (0) target = $region41
    $region40: #{cross_attention_layer.1} parent=1 // pred_region
      _
    $region41: #{cross_attention_layer.1} parent=1 // pred_fallthru
      _
    // Predicated region
    $region42: #{cross_attention_layer.1} parent=1 // pred_check
      _
    $region43: #{cross_attention_layer.1} parent=1 // pred_check_branch
      %40 = sbr.rel (0) target = $region45
    $region44: #{cross_attention_layer.1} parent=1 // pred_region
      _
    $region45: #{cross_attention_layer.1} parent=1 // pred_fallthru
      _
    // Predicated region
    $region46: #{cross_attention_layer.1} parent=1 // pred_check
      _
    $region47: #{cross_attention_layer.1} parent=1 // pred_check_branch
      %42 = sbr.rel (0) target = $region49
    $region48: #{cross_attention_layer.1} parent=1 // pred_region
      _
    $region49: #{cross_attention_layer.1} parent=1 // pred_fallthru
      _
    // Predicated region
    $region50: #{cross_attention_layer.1} parent=1 // pred_check
      _
    $region51: #{cross_attention_layer.1} parent=1 // pred_check_branch
      %44 = sbr.rel (0) target = $region53
    $region52: #{cross_attention_layer.1} parent=1 // pred_region
      _
    $region53: #{cross_attention_layer.1} parent=1 // pred_fallthru
      _
    %v45 = vld [vmem:[%s0] sm:$0xff]
    %v46 = vld [vmem:[%s0 + $0x8] sm:$0xff]
    %v47 = vld [vmem:[%s1] sm:$0xff]
    %v48 = vld [vmem:[%s1 + $0x8] sm:$0xff]
    %v49 = vld [vmem:[%s1 + $0x10] sm:$0xff]
    %v50 = vld [vmem:[%s1 + $0x18] sm:$0xff]
    %v51 = vld [vmem:[%s2] sm:$0xff]
    %v52 = vld [vmem:[%s2 + $0x8] sm:$0xff]
    %v53 = vadd.f32 %v45, %v51
    %v54 = vadd.f32 %v46, %v52
    %v55 = vld [vmem:[%s3] sm:$0xff]
    %v56 = vld [vmem:[%s3 + $0x8] sm:$0xff]
    %v57 = vld [vmem:[%s3 + $0x10] sm:$0xff]
    %v58 = vld [vmem:[%s3 + $0x18] sm:$0xff]
    %v59 = vadd.f32 %v47, %v55
    %v60 = vadd.f32 %v48, %v56
    %v61 = vadd.f32 %v49, %v57
    %v62 = vadd.f32 %v50, %v58
    %v63 = vld [vmem:[%s5] sm:$0xff]
    %v64 = vld [vmem:[%s5 + $0x8] sm:$0xff]
    %v65 = vld [vmem:[%s5 + $0x10] sm:$0xff]
    %v66 = vld [vmem:[%s5 + $0x18] sm:$0xff]
    %v67 = vld [vmem:[%s8] sm:$0x1]
    %v69 = vperm.slane %v67, 0
    %vm71 = vcmask 261120
    %v73 = vsel %vm71, %v53, 0
    %v76 = vsel %vm71, %v54, 0
    %78 = vmatpush.msra.mxu0 0.0
    %79 = vmatpush.msra.mxu0 0.0
    %80 = vmatpush.msra.mxu0 0.0
    %81 = vmatpush.msra.mxu0 0.0
    %82 = vmatpush.msra.mxu0 0.0
    %83 = vmatpush.msra.mxu0 0.0
    %84 = vmatpush.msra.mxu0 0.0
    %85 = vmatpush.msra.mxu0 0.0
    %86 = vmatpush.msra.mxu0 0.0
    %87 = vmatpush.msra.mxu0 0.0
    %88 = vmatpush.msra.mxu0 0.0
    %89 = vmatpush.msra.mxu0 0.0
    %90 = vmatpush.msra.mxu0 %v66
    %91 = vmatpush.msra.mxu0 %v65
    %92 = vmatpush.msra.mxu0 %v64
    %93 = vmatpush.msra.mxu0 %v63
    %94 = vmatmul.f32.gmra.mxu0 %v73
    %v95 = vpop.f32.mrf.mxu0
    %v96 = vadd.f32 %v69, %v95
    %97 = vmatmul.f32.gmra.mxu0 %v76
    %v98 = vpop.f32.mrf.mxu0
    %v99 = vadd.f32 %v69, %v98
    %100 = vdwg.mxu0
    %v101 = vld [vmem:[%s6] sm:$0xff]
    %v102 = vld [vmem:[%s6 + $0x8] sm:$0xff]
    %v103 = vld [vmem:[%s6 + $0x10] sm:$0xff]
    %v104 = vld [vmem:[%s6 + $0x18] sm:$0xff]
    %v106 = vsel %vm71, %v59, 0
    %v109 = vsel %vm71, %v60, 0
    %v112 = vsel %vm71, %v61, 0
    %v115 = vsel %vm71, %v62, 0
    %117 = vmatpush.msra.mxu0 0.0
    %118 = vmatpush.msra.mxu0 0.0
    %119 = vmatpush.msra.mxu0 0.0
    %120 = vmatpush.msra.mxu0 0.0
    %121 = vmatpush.msra.mxu0 0.0
    %122 = vmatpush.msra.mxu0 0.0
    %123 = vmatpush.msra.mxu0 0.0
    %124 = vmatpush.msra.mxu0 0.0
    %125 = vmatpush.msra.mxu0 0.0
    %126 = vmatpush.msra.mxu0 0.0
    %127 = vmatpush.msra.mxu0 0.0
    %128 = vmatpush.msra.mxu0 0.0
    %129 = vmatpush.msra.mxu0 %v104
    %130 = vmatpush.msra.mxu0 %v103
    %131 = vmatpush.msra.mxu0 %v102
    %132 = vmatpush.msra.mxu0 %v101
    %133 = vmatmul.f32.gmra.mxu0 %v106
    %v134 = vpop.f32.mrf.mxu0
    %v135 = vadd.f32 0.0, %v134
    %136 = vmatmul.f32.gmra.mxu0 %v109
    %v137 = vpop.f32.mrf.mxu0
    %v138 = vadd.f32 0.0, %v137
    %139 = vmatmul.f32.gmra.mxu0 %v112
    %v140 = vpop.f32.mrf.mxu0
    %v141 = vadd.f32 0.0, %v140
    %142 = vmatmul.f32.gmra.mxu0 %v115
    %v143 = vpop.f32.mrf.mxu0
    %v144 = vadd.f32 0.0, %v143
    %145 = vdwg.mxu0
    %v146 = vld [vmem:[%s7] sm:$0xff]
    %v147 = vld [vmem:[%s7 + $0x8] sm:$0xff]
    %v148 = vld [vmem:[%s7 + $0x10] sm:$0xff]
    %v149 = vld [vmem:[%s7 + $0x18] sm:$0xff]
    %v151 = vsel %vm71, %v47, 0
    %v154 = vsel %vm71, %v48, 0
    %v157 = vsel %vm71, %v49, 0
    %v160 = vsel %vm71, %v50, 0
    %162 = vmatpush.msra.mxu0 0.0
    %163 = vmatpush.msra.mxu0 0.0
    %164 = vmatpush.msra.mxu0 0.0
    %165 = vmatpush.msra.mxu0 0.0
    %166 = vmatpush.msra.mxu0 0.0
    %167 = vmatpush.msra.mxu0 0.0
    %168 = vmatpush.msra.mxu0 0.0
    %169 = vmatpush.msra.mxu0 0.0
    %170 = vmatpush.msra.mxu0 0.0
    %171 = vmatpush.msra.mxu0 0.0
    %172 = vmatpush.msra.mxu0 0.0
    %173 = vmatpush.msra.mxu0 0.0
    %174 = vmatpush.msra.mxu0 %v149
    %175 = vmatpush.msra.mxu0 %v148
    %176 = vmatpush.msra.mxu0 %v147
    %177 = vmatpush.msra.mxu0 %v146
    %178 = vmatmul.f32.gmra.mxu0 %v151
    %v179 = vpop.f32.mrf.mxu0
    %v180 = vadd.f32 0.0, %v179
    %181 = vmatmul.f32.gmra.mxu0 %v154
    %v182 = vpop.f32.mrf.mxu0
    %v183 = vadd.f32 0.0, %v182
    %184 = vmatmul.f32.gmra.mxu0 %v157
    %v185 = vpop.f32.mrf.mxu0
    %v186 = vadd.f32 0.0, %v185
    %187 = vmatmul.f32.gmra.mxu0 %v160
    %v188 = vpop.f32.mrf.mxu0
    %v189 = vadd.f32 0.0, %v188
    %190 = vdwg.mxu0
    %v191 = vld [vmem:[%s4] sm:$0xff]
    %v192 = vld [vmem:[%s4 + $0x8] sm:$0xff]
    %vm193 = vcmask 64512
    %v195 = vsel %vm193, %v96, 0
    %v198 = vsel %vm193, %v99, 0
    %v201 = vsel %vm193, %v135, 0
    %v204 = vsel %vm193, %v138, 0
    %v207 = vsel %vm193, %v141, 0
    %v210 = vsel %vm193, %v144, 0
    %212 = vmatpush.xpose.msra.mxu0 0.0
    %213 = vmatpush.xpose.msra.mxu0 0.0
    %214 = vmatpush.xpose.msra.mxu0 0.0
    %215 = vmatpush.xpose.msra.mxu0 0.0
    %216 = vmatpush.xpose.msra.mxu0 0.0
    %217 = vmatpush.xpose.msra.mxu0 0.0
    %218 = vmatpush.xpose.msra.mxu0 0.0
    %219 = vmatpush.xpose.msra.mxu0 0.0
    %220 = vmatpush.xpose.msra.mxu0 0.0
    %221 = vmatpush.xpose.msra.mxu0 0.0
    %222 = vmatpush.xpose.msra.mxu0 0.0
    %223 = vmatpush.xpose.msra.mxu0 0.0
    %224 = vmatpush.xpose.msra.mxu0 %v210
    %225 = vmatpush.xpose.msra.mxu0 %v207
    %226 = vmatpush.xpose.msra.mxu0 %v204
    %227 = vmatpush.xpose.msra.mxu0 %v201
    %228 = vmatmul.f32.gmra.mxu0 %v195
    %v229 = vpop.f32.mrf.mxu0
    %v230 = vadd.f32 %v191, %v229
    %231 = vmatmul.f32.gmra.mxu0 %v198
    %v232 = vpop.f32.mrf.mxu0
    %v233 = vadd.f32 %v192, %v232
    %234 = vdwg.mxu0
    %v235 = vsel %vm71, %v230, -inf
    %236 = vmax.xlane.f32.xlu0 %v235
    %v237 = vpop.xlane.xlu0 %236
    %v238 = vsel %vm71, %v233, -inf
    %239 = vmax.xlane.f32.xlu0 %v238
    %v240 = vpop.xlane.xlu0 %239
    %v241 = vsub.f32 %v230, %v237
    %v242 = vsub.f32 %v233, %v240
    %v243 = vmul.f32 %v241, 1.442695
    %v244 = vpow.pop %v243
    %v245 = vmul.f32 %v242, 1.442695
    %v246 = vpow.pop %v245
    %v247 = vsel %vm71, %v244, 0.0
    %248 = vadd.xlane.f32.xlu0 %v247
    %v249 = vpop.xlane.xlu0 %248
    %v250 = vsel %vm71, %v246, 0.0
    %251 = vadd.xlane.f32.xlu0 %v250
    %v252 = vpop.xlane.xlu0 %251
    %v253 = vrcp.pop %v249
    %v254 = vmul.f32 %v249, %v253
    %v255 = vsub.f32 1.0, %v254
    %v256 = vmul.f32 %v253, %v255
    %v257 = vadd.f32 %v253, %v256
    %vm258 = vweird.f32 %v249
    %vm259 = vweird.f32 %v253
    %vm260 = vmor %vm258, %vm259
    %v261 = vsel %vm260, %v253, %v257
    %v262 = vand.u32 2147483647, %v249
    %vm263 = vcmp.eq.f32.partialorder %v262, 8.507059e+37
    %v264 = vand.u32 %v249, 2147483648
    %v265 = vor.u32 1.1754944e-38, %v264
    %v266 = vsel %vm263, %v265, %v261
    %v267 = vmul.f32 %v244, %v266
    %v268 = vrcp.pop %v252
    %v269 = vmul.f32 %v252, %v268
    %v270 = vsub.f32 1.0, %v269
    %v271 = vmul.f32 %v268, %v270
    %v272 = vadd.f32 %v268, %v271
    %vm273 = vweird.f32 %v252
    %vm274 = vweird.f32 %v268
    %vm275 = vmor %vm273, %vm274
    %v276 = vsel %vm275, %v268, %v272
    %v277 = vand.u32 2147483647, %v252
    %vm278 = vcmp.eq.f32.partialorder %v277, 8.507059e+37
    %v279 = vand.u32 %v252, 2147483648
    %v280 = vor.u32 1.1754944e-38, %v279
    %v281 = vsel %vm278, %v280, %v276
    %v282 = vmul.f32 %v246, %v281
    %v284 = vsel %vm71, %v267, 0
    %v287 = vsel %vm71, %v282, 0
    %289 = vmatpush.msra.mxu0 0.0
    %290 = vmatpush.msra.mxu0 0.0
    %291 = vmatpush.msra.mxu0 0.0
    %292 = vmatpush.msra.mxu0 0.0
    %293 = vmatpush.msra.mxu0 0.0
    %294 = vmatpush.msra.mxu0 0.0
    %295 = vmatpush.msra.mxu0 0.0
    %296 = vmatpush.msra.mxu0 0.0
    %297 = vmatpush.msra.mxu0 0.0
    %298 = vmatpush.msra.mxu0 0.0
    %299 = vmatpush.msra.mxu0 0.0
    %300 = vmatpush.msra.mxu0 0.0
    %301 = vmatpush.msra.mxu0 %v189
    %302 = vmatpush.msra.mxu0 %v186
    %303 = vmatpush.msra.mxu0 %v183
    %304 = vmatpush.msra.mxu0 %v180
    %305 = vmatmul.f32.gmra.mxu0 %v284
    %v306 = vpop.f32.mrf.mxu0
    %v307 = vadd.f32 0.0, %v306
    %308 = vmatmul.f32.gmra.mxu0 %v287
    %v309 = vpop.f32.mrf.mxu0
    %v310 = vadd.f32 0.0, %v309
    %311 = vdwg.mxu0
    %312 = vrot.lane.b32.xlu0 %v96, 120
    %v313 = vpop.permute.xlu0 %312
    %314 = vrot.lane.b32.xlu0 %v99, 120
    %v315 = vpop.permute.xlu0 %314
    %316 = vrot.lane.b32.xlu0 %v135, 120
    %v317 = vpop.permute.xlu0 %316
    %318 = vrot.lane.b32.xlu0 %v138, 120
    %v319 = vpop.permute.xlu0 %318
    %320 = vrot.lane.b32.xlu0 %v141, 120
    %v321 = vpop.permute.xlu0 %320
    %322 = vrot.lane.b32.xlu0 %v144, 120
    %v323 = vpop.permute.xlu0 %322
    %v324 = vsel %vm193, %v313, 0
    %v326 = vsel %vm193, %v315, 0
    %v328 = vsel %vm193, %v317, 0
    %v330 = vsel %vm193, %v319, 0
    %v332 = vsel %vm193, %v321, 0
    %v334 = vsel %vm193, %v323, 0
    %336 = vmatpush.xpose.msra.mxu0 0.0
    %337 = vmatpush.xpose.msra.mxu0 0.0
    %338 = vmatpush.xpose.msra.mxu0 0.0
    %339 = vmatpush.xpose.msra.mxu0 0.0
    %340 = vmatpush.xpose.msra.mxu0 0.0
    %341 = vmatpush.xpose.msra.mxu0 0.0
    %342 = vmatpush.xpose.msra.mxu0 0.0
    %343 = vmatpush.xpose.msra.mxu0 0.0
    %344 = vmatpush.xpose.msra.mxu0 0.0
    %345 = vmatpush.xpose.msra.mxu0 0.0
    %346 = vmatpush.xpose.msra.mxu0 0.0
    %347 = vmatpush.xpose.msra.mxu0 0.0
    %348 = vmatpush.xpose.msra.mxu0 %v334
    %349 = vmatpush.xpose.msra.mxu0 %v332
    %350 = vmatpush.xpose.msra.mxu0 %v330
    %351 = vmatpush.xpose.msra.mxu0 %v328
    %352 = vmatmul.f32.gmra.mxu0 %v324
    %v353 = vpop.f32.mrf.mxu0
    %v354 = vadd.f32 %v191, %v353
    %355 = vmatmul.f32.gmra.mxu0 %v326
    %v356 = vpop.f32.mrf.mxu0
    %v357 = vadd.f32 %v192, %v356
    %358 = vdwg.mxu0
    %v359 = vsel %vm71, %v354, -inf
    %360 = vmax.xlane.f32.xlu0 %v359
    %v361 = vpop.xlane.xlu0 %360
    %v362 = vsel %vm71, %v357, -inf
    %363 = vmax.xlane.f32.xlu0 %v362
    %v364 = vpop.xlane.xlu0 %363
    %v365 = vsub.f32 %v354, %v361
    %v366 = vsub.f32 %v357, %v364
    %v367 = vmul.f32 %v365, 1.442695
    %v368 = vpow.pop %v367
    %v369 = vmul.f32 %v366, 1.442695
    %v370 = vpow.pop %v369
    %v371 = vsel %vm71, %v368, 0.0
    %372 = vadd.xlane.f32.xlu0 %v371
    %v373 = vpop.xlane.xlu0 %372
    %v374 = vsel %vm71, %v370, 0.0
    %375 = vadd.xlane.f32.xlu0 %v374
    %v376 = vpop.xlane.xlu0 %375
    %v377 = vrcp.pop %v373
    %v378 = vmul.f32 %v373, %v377
    %v379 = vsub.f32 1.0, %v378
    %v380 = vmul.f32 %v377, %v379
    %v381 = vadd.f32 %v377, %v380
    %vm382 = vweird.f32 %v373
    %vm383 = vweird.f32 %v377
    %vm384 = vmor %vm382, %vm383
    %v385 = vsel %vm384, %v377, %v381
    %v386 = vand.u32 2147483647, %v373
    %vm387 = vcmp.eq.f32.partialorder %v386, 8.507059e+37
    %v388 = vand.u32 %v373, 2147483648
    %v389 = vor.u32 1.1754944e-38, %v388
    %v390 = vsel %vm387, %v389, %v385
    %v391 = vmul.f32 %v368, %v390
    %v392 = vrcp.pop %v376
    %v393 = vmul.f32 %v376, %v392
    %v394 = vsub.f32 1.0, %v393
    %v395 = vmul.f32 %v392, %v394
    %v396 = vadd.f32 %v392, %v395
    %vm397 = vweird.f32 %v376
    %vm398 = vweird.f32 %v392
    %vm399 = vmor %vm397, %vm398
    %v400 = vsel %vm399, %v392, %v396
    %v401 = vand.u32 2147483647, %v376
    %vm402 = vcmp.eq.f32.partialorder %v401, 8.507059e+37
    %v403 = vand.u32 %v376, 2147483648
    %v404 = vor.u32 1.1754944e-38, %v403
    %v405 = vsel %vm402, %v404, %v400
    %v406 = vmul.f32 %v370, %v405
    %411 = vrot.lane.b32.xlu0 %v180, 120
    %v412 = vpop.permute.xlu0 %411
    %413 = vrot.lane.b32.xlu0 %v183, 120
    %v414 = vpop.permute.xlu0 %413
    %415 = vrot.lane.b32.xlu0 %v186, 120
    %v416 = vpop.permute.xlu0 %415
    %417 = vrot.lane.b32.xlu0 %v189, 120
    %v418 = vpop.permute.xlu0 %417
    %v424 = vsel %vm71, %v391, 0
    %v427 = vsel %vm71, %v406, 0
    %429 = vmatpush.msra.mxu0 0.0
    %430 = vmatpush.msra.mxu0 0.0
    %431 = vmatpush.msra.mxu0 0.0
    %432 = vmatpush.msra.mxu0 0.0
    %433 = vmatpush.msra.mxu0 0.0
    %434 = vmatpush.msra.mxu0 0.0
    %435 = vmatpush.msra.mxu0 0.0
    %436 = vmatpush.msra.mxu0 0.0
    %437 = vmatpush.msra.mxu0 0.0
    %438 = vmatpush.msra.mxu0 0.0
    %439 = vmatpush.msra.mxu0 0.0
    %440 = vmatpush.msra.mxu0 0.0
    %441 = vmatpush.msra.mxu0 %v418
    %442 = vmatpush.msra.mxu0 %v416
    %443 = vmatpush.msra.mxu0 %v414
    %444 = vmatpush.msra.mxu0 %v412
    %445 = vmatmul.f32.gmra.mxu0 %v424
    %v446 = vpop.f32.mrf.mxu0
    %v447 = vadd.f32 0.0, %v446
    %448 = vmatmul.f32.gmra.mxu0 %v427
    %v449 = vpop.f32.mrf.mxu0
    %v450 = vadd.f32 0.0, %v449
    %451 = vdwg.mxu0
    %452 = vrot.lane.b32.xlu0 %v96, 112
    %v453 = vpop.permute.xlu0 %452
    %454 = vrot.lane.b32.xlu0 %v99, 112
    %v455 = vpop.permute.xlu0 %454
    %456 = vrot.lane.b32.xlu0 %v135, 112
    %v457 = vpop.permute.xlu0 %456
    %458 = vrot.lane.b32.xlu0 %v138, 112
    %v459 = vpop.permute.xlu0 %458
    %460 = vrot.lane.b32.xlu0 %v141, 112
    %v461 = vpop.permute.xlu0 %460
    %462 = vrot.lane.b32.xlu0 %v144, 112
    %v463 = vpop.permute.xlu0 %462
    %v464 = vsel %vm193, %v453, 0
    %v466 = vsel %vm193, %v455, 0
    %v468 = vsel %vm193, %v457, 0
    %v470 = vsel %vm193, %v459, 0
    %v472 = vsel %vm193, %v461, 0
    %v474 = vsel %vm193, %v463, 0
    %476 = vmatpush.xpose.msra.mxu0 0.0
    %477 = vmatpush.xpose.msra.mxu0 0.0
    %478 = vmatpush.xpose.msra.mxu0 0.0
    %479 = vmatpush.xpose.msra.mxu0 0.0
    %480 = vmatpush.xpose.msra.mxu0 0.0
    %481 = vmatpush.xpose.msra.mxu0 0.0
    %482 = vmatpush.xpose.msra.mxu0 0.0
    %483 = vmatpush.xpose.msra.mxu0 0.0
    %484 = vmatpush.xpose.msra.mxu0 0.0
    %485 = vmatpush.xpose.msra.mxu0 0.0
    %486 = vmatpush.xpose.msra.mxu0 0.0
    %487 = vmatpush.xpose.msra.mxu0 0.0
    %488 = vmatpush.xpose.msra.mxu0 %v474
    %489 = vmatpush.xpose.msra.mxu0 %v472
    %490 = vmatpush.xpose.msra.mxu0 %v470
    %491 = vmatpush.xpose.msra.mxu0 %v468
    %492 = vmatmul.f32.gmra.mxu0 %v464
    %v493 = vpop.f32.mrf.mxu0
    %v494 = vadd.f32 %v191, %v493
    %495 = vmatmul.f32.gmra.mxu0 %v466
    %v496 = vpop.f32.mrf.mxu0
    %v497 = vadd.f32 %v192, %v496
    %498 = vdwg.mxu0
    %v499 = vsel %vm71, %v494, -inf
    %500 = vmax.xlane.f32.xlu0 %v499
    %v501 = vpop.xlane.xlu0 %500
    %v502 = vsel %vm71, %v497, -inf
    %503 = vmax.xlane.f32.xlu0 %v502
    %v504 = vpop.xlane.xlu0 %503
    %v505 = vsub.f32 %v494, %v501
    %v506 = vsub.f32 %v497, %v504
    %v507 = vmul.f32 %v505, 1.442695
    %v508 = vpow.pop %v507
    %v509 = vmul.f32 %v506, 1.442695
    %v510 = vpow.pop %v509
    %v511 = vsel %vm71, %v508, 0.0
    %512 = vadd.xlane.f32.xlu0 %v511
    %v513 = vpop.xlane.xlu0 %512
    %v514 = vsel %vm71, %v510, 0.0
    %515 = vadd.xlane.f32.xlu0 %v514
    %v516 = vpop.xlane.xlu0 %515
    %v517 = vrcp.pop %v513
    %v518 = vmul.f32 %v513, %v517
    %v519 = vsub.f32 1.0, %v518
    %v520 = vmul.f32 %v517, %v519
    %v521 = vadd.f32 %v517, %v520
    %vm522 = vweird.f32 %v513
    %vm523 = vweird.f32 %v517
    %vm524 = vmor %vm522, %vm523
    %v525 = vsel %vm524, %v517, %v521
    %v526 = vand.u32 2147483647, %v513
    %vm527 = vcmp.eq.f32.partialorder %v526, 8.507059e+37
    %v528 = vand.u32 %v513, 2147483648
    %v529 = vor.u32 1.1754944e-38, %v528
    %v530 = vsel %vm527, %v529, %v525
    %v531 = vmul.f32 %v508, %v530
    %v532 = vrcp.pop %v516
    %v533 = vmul.f32 %v516, %v532
    %v534 = vsub.f32 1.0, %v533
    %v535 = vmul.f32 %v532, %v534
    %v536 = vadd.f32 %v532, %v535
    %vm537 = vweird.f32 %v516
    %vm538 = vweird.f32 %v532
    %vm539 = vmor %vm537, %vm538
    %v540 = vsel %vm539, %v532, %v536
    %v541 = vand.u32 2147483647, %v516
    %vm542 = vcmp.eq.f32.partialorder %v541, 8.507059e+37
    %v543 = vand.u32 %v516, 2147483648
    %v544 = vor.u32 1.1754944e-38, %v543
    %v545 = vsel %vm542, %v544, %v540
    %v546 = vmul.f32 %v510, %v545
    %547 = vrot.lane.b32.xlu0 %v180, 112
    %v548 = vpop.permute.xlu0 %547
    %549 = vrot.lane.b32.xlu0 %v183, 112
    %v550 = vpop.permute.xlu0 %549
    %551 = vrot.lane.b32.xlu0 %v186, 112
    %v552 = vpop.permute.xlu0 %551
    %553 = vrot.lane.b32.xlu0 %v189, 112
    %v554 = vpop.permute.xlu0 %553
    %v560 = vsel %vm71, %v531, 0
    %v563 = vsel %vm71, %v546, 0
    %565 = vmatpush.msra.mxu0 0.0
    %566 = vmatpush.msra.mxu0 0.0
    %567 = vmatpush.msra.mxu0 0.0
    %568 = vmatpush.msra.mxu0 0.0
    %569 = vmatpush.msra.mxu0 0.0
    %570 = vmatpush.msra.mxu0 0.0
    %571 = vmatpush.msra.mxu0 0.0
    %572 = vmatpush.msra.mxu0 0.0
    %573 = vmatpush.msra.mxu0 0.0
    %574 = vmatpush.msra.mxu0 0.0
    %575 = vmatpush.msra.mxu0 0.0
    %576 = vmatpush.msra.mxu0 0.0
    %577 = vmatpush.msra.mxu0 %v554
    %578 = vmatpush.msra.mxu0 %v552
    %579 = vmatpush.msra.mxu0 %v550
    %580 = vmatpush.msra.mxu0 %v548
    %581 = vmatmul.f32.gmra.mxu0 %v560
    %v582 = vpop.f32.mrf.mxu0
    %v583 = vadd.f32 0.0, %v582
    %584 = vmatmul.f32.gmra.mxu0 %v563
    %v585 = vpop.f32.mrf.mxu0
    %v586 = vadd.f32 0.0, %v585
    %587 = vdwg.mxu0
    %588 = vrot.lane.b32.xlu0 %v96, 104
    %v589 = vpop.permute.xlu0 %588
    %590 = vrot.lane.b32.xlu0 %v99, 104
    %v591 = vpop.permute.xlu0 %590
    %592 = vrot.lane.b32.xlu0 %v135, 104
    %v593 = vpop.permute.xlu0 %592
    %594 = vrot.lane.b32.xlu0 %v138, 104
    %v595 = vpop.permute.xlu0 %594
    %596 = vrot.lane.b32.xlu0 %v141, 104
    %v597 = vpop.permute.xlu0 %596
    %598 = vrot.lane.b32.xlu0 %v144, 104
    %v599 = vpop.permute.xlu0 %598
    %v600 = vsel %vm193, %v589, 0
    %v602 = vsel %vm193, %v591, 0
    %v604 = vsel %vm193, %v593, 0
    %v606 = vsel %vm193, %v595, 0
    %v608 = vsel %vm193, %v597, 0
    %v610 = vsel %vm193, %v599, 0
    %612 = vmatpush.xpose.msra.mxu0 0.0
    %613 = vmatpush.xpose.msra.mxu0 0.0
    %614 = vmatpush.xpose.msra.mxu0 0.0
    %615 = vmatpush.xpose.msra.mxu0 0.0
    %616 = vmatpush.xpose.msra.mxu0 0.0
    %617 = vmatpush.xpose.msra.mxu0 0.0
    %618 = vmatpush.xpose.msra.mxu0 0.0
    %619 = vmatpush.xpose.msra.mxu0 0.0
    %620 = vmatpush.xpose.msra.mxu0 0.0
    %621 = vmatpush.xpose.msra.mxu0 0.0
    %622 = vmatpush.xpose.msra.mxu0 0.0
    %623 = vmatpush.xpose.msra.mxu0 0.0
    %624 = vmatpush.xpose.msra.mxu0 %v610
    %625 = vmatpush.xpose.msra.mxu0 %v608
    %626 = vmatpush.xpose.msra.mxu0 %v606
    %627 = vmatpush.xpose.msra.mxu0 %v604
    %628 = vmatmul.f32.gmra.mxu0 %v600
    %v629 = vpop.f32.mrf.mxu0
    %v630 = vadd.f32 %v191, %v629
    %631 = vmatmul.f32.gmra.mxu0 %v602
    %v632 = vpop.f32.mrf.mxu0
    %v633 = vadd.f32 %v192, %v632
    %634 = vdwg.mxu0
    %v635 = vsel %vm71, %v630, -inf
    %636 = vmax.xlane.f32.xlu0 %v635
    %v637 = vpop.xlane.xlu0 %636
    %v638 = vsel %vm71, %v633, -inf
    %639 = vmax.xlane.f32.xlu0 %v638
    %v640 = vpop.xlane.xlu0 %639
    %v641 = vsub.f32 %v630, %v637
    %v642 = vsub.f32 %v633, %v640
    %v643 = vmul.f32 %v641, 1.442695
    %v644 = vpow.pop %v643
    %v645 = vmul.f32 %v642, 1.442695
    %v646 = vpow.pop %v645
    %v647 = vsel %vm71, %v644, 0.0
    %648 = vadd.xlane.f32.xlu0 %v647
    %v649 = vpop.xlane.xlu0 %648
    %v650 = vsel %vm71, %v646, 0.0
    %651 = vadd.xlane.f32.xlu0 %v650
    %v652 = vpop.xlane.xlu0 %651
    %v653 = vrcp.pop %v649
    %v654 = vmul.f32 %v649, %v653
    %v655 = vsub.f32 1.0, %v654
    %v656 = vmul.f32 %v653, %v655
    %v657 = vadd.f32 %v653, %v656
    %vm658 = vweird.f32 %v649
    %vm659 = vweird.f32 %v653
    %vm660 = vmor %vm658, %vm659
    %v661 = vsel %vm660, %v653, %v657
    %v662 = vand.u32 2147483647, %v649
    %vm663 = vcmp.eq.f32.partialorder %v662, 8.507059e+37
    %v664 = vand.u32 %v649, 2147483648
    %v665 = vor.u32 1.1754944e-38, %v664
    %v666 = vsel %vm663, %v665, %v661
    %v667 = vmul.f32 %v644, %v666
    %v668 = vrcp.pop %v652
    %v669 = vmul.f32 %v652, %v668
    %v670 = vsub.f32 1.0, %v669
    %v671 = vmul.f32 %v668, %v670
    %v672 = vadd.f32 %v668, %v671
    %vm673 = vweird.f32 %v652
    %vm674 = vweird.f32 %v668
    %vm675 = vmor %vm673, %vm674
    %v676 = vsel %vm675, %v668, %v672
    %v677 = vand.u32 2147483647, %v652
    %vm678 = vcmp.eq.f32.partialorder %v677, 8.507059e+37
    %v679 = vand.u32 %v652, 2147483648
    %v680 = vor.u32 1.1754944e-38, %v679
    %v681 = vsel %vm678, %v680, %v676
    %v682 = vmul.f32 %v646, %v681
    %683 = vrot.lane.b32.xlu0 %v180, 104
    %v684 = vpop.permute.xlu0 %683
    %685 = vrot.lane.b32.xlu0 %v183, 104
    %v686 = vpop.permute.xlu0 %685
    %687 = vrot.lane.b32.xlu0 %v186, 104
    %v688 = vpop.permute.xlu0 %687
    %689 = vrot.lane.b32.xlu0 %v189, 104
    %v690 = vpop.permute.xlu0 %689
    %v696 = vsel %vm71, %v667, 0
    %v699 = vsel %vm71, %v682, 0
    %701 = vmatpush.msra.mxu0 0.0
    %702 = vmatpush.msra.mxu0 0.0
    %703 = vmatpush.msra.mxu0 0.0
    %704 = vmatpush.msra.mxu0 0.0
    %705 = vmatpush.msra.mxu0 0.0
    %706 = vmatpush.msra.mxu0 0.0
    %707 = vmatpush.msra.mxu0 0.0
    %708 = vmatpush.msra.mxu0 0.0
    %709 = vmatpush.msra.mxu0 0.0
    %710 = vmatpush.msra.mxu0 0.0
    %711 = vmatpush.msra.mxu0 0.0
    %712 = vmatpush.msra.mxu0 0.0
    %713 = vmatpush.msra.mxu0 %v690
    %714 = vmatpush.msra.mxu0 %v688
    %715 = vmatpush.msra.mxu0 %v686
    %716 = vmatpush.msra.mxu0 %v684
    %717 = vmatmul.f32.gmra.mxu0 %v696
    %v718 = vpop.f32.mrf.mxu0
    %v719 = vadd.f32 0.0, %v718
    %720 = vmatmul.f32.gmra.mxu0 %v699
    %v721 = vpop.f32.mrf.mxu0
    %v722 = vadd.f32 0.0, %v721
    %723 = vdwg.mxu0
    %726 = vrot.lane.b32.xlu0 %v447, 8
    %v727 = vpop.permute.xlu0 %726
    %728 = vrot.lane.b32.xlu0 %v450, 8
    %v729 = vpop.permute.xlu0 %728
    %734 = vrot.lane.b32.xlu0 %v583, 16
    %v735 = vpop.permute.xlu0 %734
    %736 = vrot.lane.b32.xlu0 %v586, 16
    %v737 = vpop.permute.xlu0 %736
    %742 = vrot.lane.b32.xlu0 %v719, 24
    %v743 = vpop.permute.xlu0 %742
    %744 = vrot.lane.b32.xlu0 %v722, 24
    %v745 = vpop.permute.xlu0 %744
    %v748 = vsel %vm193, %v307, %v727
    %v749 = vsel %vm193, %v310, %v729
    %vm750 = vcmask 130048
    %v751 = vsel %vm750, %v748, %v735
    %v752 = vsel %vm750, %v749, %v737
    %vm753 = vcmask 195584
    %v754 = vsel %vm753, %v751, %v743
    %v755 = vsel %vm753, %v752, %v745
    %v756 = vld [vmem:[%s9] sm:$0xff]
    %v757 = vld [vmem:[%s9 + $0x8] sm:$0xff]
    %v758 = vld [vmem:[%s9 + $0x10] sm:$0xff]
    %v759 = vld [vmem:[%s9 + $0x18] sm:$0xff]
    %v761 = vsel %vm71, %v754, 0
    %v764 = vsel %vm71, %v755, 0
    %766 = vmatpush.msra.mxu0 0.0
    %767 = vmatpush.msra.mxu0 0.0
    %768 = vmatpush.msra.mxu0 0.0
    %769 = vmatpush.msra.mxu0 0.0
    %770 = vmatpush.msra.mxu0 0.0
    %771 = vmatpush.msra.mxu0 0.0
    %772 = vmatpush.msra.mxu0 0.0
    %773 = vmatpush.msra.mxu0 0.0
    %774 = vmatpush.msra.mxu0 0.0
    %775 = vmatpush.msra.mxu0 0.0
    %776 = vmatpush.msra.mxu0 0.0
    %777 = vmatpush.msra.mxu0 0.0
    %778 = vmatpush.msra.mxu0 %v759
    %779 = vmatpush.msra.mxu0 %v758
    %780 = vmatpush.msra.mxu0 %v757
    %781 = vmatpush.msra.mxu0 %v756
    %782 = vmatmul.f32.gmra.mxu0 %v761
    %v783 = vpop.f32.mrf.mxu0
    %v784 = vadd.f32 0.0, %v783
    %785 = vmatmul.f32.gmra.mxu0 %v764
    %v786 = vpop.f32.mrf.mxu0
    %v787 = vadd.f32 0.0, %v786
    %788 = vdwg.mxu0
    %v789 = vadd.f32 %v45, %v784
    %v790 = vadd.f32 %v46, %v787
    %v791 = vld [vmem:[%s10] sm:$0x1]
    %v793 = vperm.slane %v791, 0
    %v795 = vadd.f32 %v789, %v793
    %v796 = vadd.f32 %v790, %v793
    %v797 = vsel %vm71, %v795, 0.0
    %798 = vadd.xlane.f32.xlu0 %v797
    %v799 = vpop.xlane.xlu0 %798
    %v800 = vsel %vm71, %v796, 0.0
    %801 = vadd.xlane.f32.xlu0 %v800
    %v802 = vpop.xlane.xlu0 %801
    %v803 = vrcp.pop 32.0
    %v804 = vmul.f32 32.0, %v803
    %v805 = vsub.f32 1.0, %v804
    %v806 = vmul.f32 %v803, %v805
    %v807 = vadd.f32 %v803, %v806
    %vm808 = vweird.f32 %v803
    %v809 = vsel %vm808, %v803, %v807
    %v810 = vmul.f32 %v799, %v809
    %v811 = vmul.f32 %v802, %v809
    %v812 = vsub.f32 %v795, %v810
    %v813 = vsub.f32 %v796, %v811
    %v814 = vmul.f32 %v812, %v812
    %v815 = vmul.f32 %v813, %v813
    %v816 = vsel %vm71, %v814, 0.0
    %817 = vadd.xlane.f32.xlu0 %v816
    %v818 = vpop.xlane.xlu0 %817
    %v819 = vsel %vm71, %v815, 0.0
    %820 = vadd.xlane.f32.xlu0 %v819
    %v821 = vpop.xlane.xlu0 %820
    %v822 = vmul.f32 %v818, %v809
    %v823 = vmul.f32 %v821, %v809
    %v824 = vadd.f32 %v822, 1e-05
    %v825 = vadd.f32 %v823, 1e-05
    %v826 = vrsqrt.pop %v824
    %v827 = vmul.f32 %v826, %v824
    %v828 = vmul.f32 %v827, %v826
    %v829 = vmul.f32 0.5, %v828
    %v830 = vsub.f32 1.5, %v829
    %v831 = vmul.f32 %v826, %v830
    %vm832 = vweird.f32 %v824
    %vm833 = vweird.f32 %v826
    %vm834 = vmor %vm832, %vm833
    %v835 = vsel %vm834, %v826, %v831
    %v836 = vrsqrt.pop %v825
    %v837 = vmul.f32 %v836, %v825
    %v838 = vmul.f32 %v837, %v836
    %v839 = vmul.f32 0.5, %v838
    %v840 = vsub.f32 1.5, %v839
    %v841 = vmul.f32 %v836, %v840
    %vm842 = vweird.f32 %v825
    %vm843 = vweird.f32 %v836
    %vm844 = vmor %vm842, %vm843
    %v845 = vsel %vm844, %v836, %v841
    %v846 = vmul.f32 %v812, %v835
    %v847 = vmul.f32 %v813, %v845
    %v848 = vld [vmem:[%s11] sm:$0x1]
    %v850 = vperm.slane %v848, 0
    %v852 = vmul.f32 %v846, %v850
    %v853 = vmul.f32 %v847, %v850
    %v854 = vld [vmem:[%s12] sm:$0x1]
    %v856 = vperm.slane %v854, 0
    %v858 = vadd.f32 %v852, %v856
    %v859 = vadd.f32 %v853, %v856
    %860 = vst.msk [vmem:[#allocation2] sm:$0xff] %vm71, %v858
    %861 = vst.msk [vmem:[#allocation2 + $0x8] sm:$0xff] %vm71, %v859
    // Predicated region
    $region54: #{cross_attention_layer.1} parent=1 // pred_check
      _
    $region55: #{cross_attention_layer.1} parent=1 // pred_check_branch
      %863 = sbr.rel (0) target = $region57
    $region56: #{cross_attention_layer.1} parent=1 // pred_region
      %865 = vsyncadd [#allocation3], 0
      %s866 = sshll.u32 [#allocation2], 4
      %s867 = int_to_ptr.vmem [resolvable:$true] %s866
      %s868 = sshll.u32 %s13, 4
      %s869 = int_to_ptr.hbm [resolvable:$true] %s868
      %874 = dma.vmem_to_hbm [thread:$0]  %s867, 256, %s869, [#allocation3], 128, 128, 8
    $region57: #{cross_attention_layer.1} parent=1 // pred_fallthru
      _
    // Predicated region
    $region58: #{cross_attention_layer.1} parent=1 // pred_check
      _
    $region59: #{cross_attention_layer.1} parent=1 // pred_check_branch
      %876 = sbr.rel (0) target = $region61
    $region60: #{cross_attention_layer.1} parent=1 // pred_region
      %878 = dma.done [#allocation3], 256
    $region61: #{cross_attention_layer.1} parent=1 // pred_fallthru
      _
    %879 = vsyncpa [#allocation3], 1

</llo_original>
